<compile_context>
chip_gen: v6e
topology: v6e:2x2x1
jax: 0.10.0
libtpu: 0.0.40
codegen_flags: <defaults>
</compile_context>

<pallas_src>
import functools

import jax
import jax.numpy as jnp
from jax.experimental import pallas as pl
from jax.experimental.pallas import tpu as pltpu


def _combiner_kernel(enc_ref, att_ref, out_ref, acc_ref, *, num_folds, h):
    k = pl.program_id(1)

    # Zero the f32 accumulator at the start of each batch-tile's reduction.
    @pl.when(k == 0)
    def _():
        acc_ref[...] = jnp.zeros_like(acc_ref)

    # Elementwise multiply (VPU) with f32 accumulation (v5e-safe for bf16 in),
    # reduce over the sublane (sequence) axis — cheap VPU add tree.
    prod = att_ref[...].astype(jnp.float32) * enc_ref[...].astype(jnp.float32)
    acc_ref[...] += jnp.sum(prod, axis=1)  # (TB, TS, HF) -> (TB, HF)

    # Finalize only on the last reduction step: un-fold the lane-packed seq
    # groups back to H (one-time, tiny), tanh on the EUP, cast, store.
    @pl.when(k == pl.num_programs(1) - 1)
    def _():
        acc = acc_ref[...]
        res = acc[:, 0:h]
        for f in range(1, num_folds):
            res = res + acc[:, f * h:(f + 1) * h]
        out_ref[...] = jnp.tanh(res).astype(out_ref.dtype)


def _largest_divisor(n, cap, multiple=1):
    """Largest divisor of n that is <= cap and a multiple of `multiple` (0 if none)."""
    best = 0
    for d in range(1, min(n, cap) + 1):
        if n % d == 0 and d % multiple == 0:
            best = d
    return best


def combiner(encoded_sequence, attention_values, *, max_block_bytes=2 * 1024 * 1024):
    """encoded_sequence, attention_values: (B, S, H). Returns flat (B*H,)."""
    B, S, H = encoded_sequence.shape
    assert attention_values.shape == (B, S, H)
    out_dtype = jnp.result_type(encoded_sequence.dtype, attention_values.dtype)

    # ---- Lane-dense layout: if H < 128, fold a factor of S into the lane axis.
    # (B, S, H) -> (B, S//F, F*H) is a free, contiguous reshape (no transpose,
    # no extra HBM pass); the kernel un-folds once at the final step.
    if H < 128 and 128 % H == 0 and S % (128 // H) == 0:
        fold = 128 // H
    else:
        fold = 1
    hf = fold * H
    sf = S // fold
    enc = encoded_sequence.reshape(B, sf, hf)
    att = attention_values.reshape(B, sf, hf)

    itemsize = jnp.dtype(enc.dtype).itemsize

    # ---- Batch tile ("parallel" axis, sharded across TensorCores on v7x).
    # Output block sublane dim must be a multiple of 8 or the full B.
    if B <= 8:
        tb = B
    else:
        tb = _largest_divisor(B, 8, multiple=8) or B

    # ---- Sequence tile (trailing "arbitrary" reduction axis).
    # Target ~2 MiB per input block: with double buffering that is
    # 2 inputs x 2 buffers x 2 MiB = 8 MiB (+ small f32 accumulator), which fits
    # comfortably on v5e/v6e (128 MiB phys VMEM) and v7x (64 MiB phys VMEM),
    # while being large enough to hide the ~0.35 us per-grid-step overhead.
    ts_cap = max(1, max_block_bytes // (tb * hf * itemsize))
    if sf <= ts_cap:
        ts = sf
    else:
        ts = _largest_divisor(sf, ts_cap, multiple=8) or sf

    grid = (B // tb, sf // ts)

    kernel = functools.partial(_combiner_kernel, num_folds=fold, h=H)

    out = pl.pallas_call(
        kernel,
        out_shape=jax.ShapeDtypeStruct((B, H), out_dtype),
        grid_spec=pltpu.PrefetchScalarGridSpec(
            num_scalar_prefetch=0,
            grid=grid,
            in_specs=[
                pl.BlockSpec((tb, ts, hf), lambda b, k: (b, k, 0)),
                pl.BlockSpec((tb, ts, hf), lambda b, k: (b, k, 0)),
            ],
            out_specs=pl.BlockSpec((tb, H), lambda b, k: (b, 0)),
            scratch_shapes=[pltpu.VMEM((tb, hf), jnp.float32)],
        ),
        compiler_params=pltpu.CompilerParams(
            # B is independent -> "parallel"; S is the reduction -> trailing
            # "arbitrary" axis (output block resident across it).
            dimension_semantics=("parallel", "arbitrary"),
            # Explicit scoped-VMEM limit (v5e default is only 16 MiB).
            vmem_limit_bytes=32 * 1024 * 1024,
        ),
    )(enc, att)

    # torch: .view(-1) -> flatten (tanh is elementwise, already applied in-kernel).
    return out.reshape(-1)


def _reference(encoded_sequence, attention_values):
    return jnp.tanh(
        jnp.sum(attention_values * encoded_sequence, axis=1).reshape(-1)
    )


if __name__ == "__main__":
    key = jax.random.PRNGKey(0)
    k1, k2 = jax.random.split(key)

    # Shapes implied by the module: (batch=2, seq=8, hidden=32).
    B, S, H = 2, 8, 32
    enc = jax.random.normal(k1, (B, S, H), dtype=jnp.float32)
    att = jax.random.normal(k2, (B, S, H), dtype=jnp.float32)

    result = combiner(enc, att)
    jax.block_until_ready(result)
    assert result.shape == (B * H,)
    assert jnp.allclose(result, _reference(enc, att), atol=1e-5, rtol=1e-5)

    # Second (still small) case that forces a multi-step reduction grid, to
    # exercise the accumulator init / finalize (pl.when) path end to end.
    k3, k4 = jax.random.split(jax.random.PRNGKey(1))
    B2, S2, H2 = 2, 64, 32
    enc2 = jax.random.normal(k3, (B2, S2, H2), dtype=jnp.float32)
    att2 = jax.random.normal(k4, (B2, S2, H2), dtype=jnp.float32)
    result2 = combiner(enc2, att2, max_block_bytes=8 * 1024)
    jax.block_until_ready(result2)
    assert jnp.allclose(result2, _reference(enc2, att2), atol=1e-5, rtol=1e-5)

    print("KERNEL_OK")
</pallas_src>

<mosaic_0001>
module attributes {stable_mosaic.version = 11 : i64} {
  func.func @_combiner_kernel(%arg0: i32, %arg1: i32, %arg2: memref<2x2x128xf32, #tpu.memory_space<vmem>>, %arg3: memref<2x2x128xf32, #tpu.memory_space<vmem>>, %arg4: memref<2x32xf32, #tpu.memory_space<vmem>>, %arg5: memref<2x128xf32, #tpu.memory_space<vmem>>) attributes {dimension_semantics = [#tpu.dimension_semantics<parallel>, #tpu.dimension_semantics<arbitrary>], iteration_bounds = array<i64: 1, 1>, scalar_prefetch = 0 : i64, scratch_operands = 1 : i64, tpu.core_type = #tpu.core_type<tc>, window_params = [{transform_indices = @transform_0, window_bounds = array<i64: 2, 2, 128>}, {transform_indices = @transform_1, window_bounds = array<i64: 2, 2, 128>}, {transform_indices = @transform_2, window_bounds = array<i64: 2, 32>}]} {
    %c0_i32 = arith.constant 0 : i32
    %0 = arith.cmpi eq, %arg1, %c0_i32 : i32
    %1 = arith.extui %0 : i1 to i32
    %c0_i32_0 = arith.constant 0 : i32
    %2 = arith.cmpi ne, %1, %c0_i32_0 : i32
    scf.if %2 {
      %cst_12 = arith.constant 0.000000e+00 : f32
      %13 = vector.broadcast %cst_12 : f32 to vector<2x128xf32>
      %c0_13 = arith.constant 0 : index
      %c0_14 = arith.constant 0 : index
      %14 = vector.load %arg5[%c0_13, %c0_14] : memref<2x128xf32, #tpu.memory_space<vmem>>, vector<2x128xf32>
      tpu.vector_store %arg5[%c0_13, %c0_14], %13 {strides = array<i32>} : memref<2x128xf32, #tpu.memory_space<vmem>>, vector<2x128xf32>,
    } else {
    }
    %c0 = arith.constant 0 : index
    %c0_1 = arith.constant 0 : index
    %c0_2 = arith.constant 0 : index
    %3 = vector.load %arg3[%c0, %c0_1, %c0_2] : memref<2x2x128xf32, #tpu.memory_space<vmem>>, vector<2x2x128xf32>
    %c0_3 = arith.constant 0 : index
    %c0_4 = arith.constant 0 : index
    %c0_5 = arith.constant 0 : index
    %4 = vector.load %arg2[%c0_3, %c0_4, %c0_5] : memref<2x2x128xf32, #tpu.memory_space<vmem>>, vector<2x2x128xf32>
    %5 = arith.mulf %3, %4 : vector<2x2x128xf32>
    %c0_6 = arith.constant 0 : index
    %c0_7 = arith.constant 0 : index
    %6 = vector.load %arg5[%c0_6, %c0_7] : memref<2x128xf32, #tpu.memory_space<vmem>>, vector<2x128xf32>
    %cst = arith.constant dense<0.000000e+00> : vector<2x128xf32>
    %7 = vector.multi_reduction <add>, %5, %cst [1] : vector<2x2x128xf32> to vector<2x128xf32>
    %8 = arith.addf %6, %7 : vector<2x128xf32>
    %c0_8 = arith.constant 0 : index
    %c0_9 = arith.constant 0 : index
    %9 = vector.load %arg5[%c0_8, %c0_9] : memref<2x128xf32, #tpu.memory_space<vmem>>, vector<2x128xf32>
    tpu.vector_store %arg5[%c0_8, %c0_9], %8 {strides = array<i32>} : memref<2x128xf32, #tpu.memory_space<vmem>>, vector<2x128xf32>,
    %c0_i32_10 = arith.constant 0 : i32
    %10 = arith.cmpi eq, %arg1, %c0_i32_10 : i32
    %11 = arith.extui %10 : i1 to i32
    %c0_i32_11 = arith.constant 0 : i32
    %12 = arith.cmpi ne, %11, %c0_i32_11 : i32
    scf.if %12 {
      %c0_12 = arith.constant 0 : index
      %c0_13 = arith.constant 0 : index
      %13 = vector.load %arg5[%c0_12, %c0_13] : memref<2x128xf32, #tpu.memory_space<vmem>>, vector<2x128xf32>
      %14 = vector.extract_strided_slice %13 {offsets = [0, 0], sizes = [2, 32], strides = [1, 1]} : vector<2x128xf32> to vector<2x32xf32>
      %15 = vector.extract_strided_slice %13 {offsets = [0, 32], sizes = [2, 32], strides = [1, 1]} : vector<2x128xf32> to vector<2x32xf32>
      %16 = arith.addf %14, %15 : vector<2x32xf32>
      %17 = vector.extract_strided_slice %13 {offsets = [0, 64], sizes = [2, 32], strides = [1, 1]} : vector<2x128xf32> to vector<2x32xf32>
      %18 = arith.addf %16, %17 : vector<2x32xf32>
      %19 = vector.extract_strided_slice %13 {offsets = [0, 96], sizes = [2, 32], strides = [1, 1]} : vector<2x128xf32> to vector<2x32xf32>
      %20 = arith.addf %18, %19 : vector<2x32xf32>
      %21 = math.tanh %20 : vector<2x32xf32>
      %c0_14 = arith.constant 0 : index
      %c0_15 = arith.constant 0 : index
      %22 = vector.load %arg4[%c0_14, %c0_15] : memref<2x32xf32, #tpu.memory_space<vmem>>, vector<2x32xf32>
      tpu.vector_store %arg4[%c0_14, %c0_15], %21 {strides = array<i32>} : memref<2x32xf32, #tpu.memory_space<vmem>>, vector<2x32xf32>,
    } else {
    }
    return
  }
  func.func @transform_0(%arg0: i32, %arg1: i32) -> (i32, i32, i32) {
    %c0_i32 = arith.constant 0 : i32
    %c0_i32_0 = arith.constant 0 : i32
    return %arg0, %arg1, %c0_i32 : i32, i32, i32
  }
  func.func @transform_1(%arg0: i32, %arg1: i32) -> (i32, i32, i32) {
    %c0_i32 = arith.constant 0 : i32
    %c0_i32_0 = arith.constant 0 : i32
    return %arg0, %arg1, %c0_i32 : i32, i32, i32
  }
  func.func @transform_2(%arg0: i32, %arg1: i32) -> (i32, i32) {
    %c0_i32 = arith.constant 0 : i32
    %c0_i32_0 = arith.constant 0 : i32
    return %arg0, %c0_i32 : i32, i32
  }
}

</mosaic_0001>

<llo_original>
// kernel: tpu_custom_call.1
$region0: #{tpu_custom_call.1}
  #allocation0 [shape = 'u32[]', space=smem, size = 0x4, offset = 0x4, fixed_abs, tag = 'smem constant byte address 0x4 - core index']
  #allocation1 [shape = 'u32[144,128]{1,0:T(1,128)}', space=vmem, size = 0x12000, scoped, tag = 'internal scratch']
  #allocation2 [shape = 'f32[2,128]{1,0:T(2,128)}', space=vmem, size = 0x400, scoped, tag = 'scratch operand']
  %s0 = inlined_call_operand.hbm [shape: f32[2,2,128], index: 0, kind: input, shape index: {}]
  %s1 = inlined_call_operand.hbm [shape: f32[2,2,128], index: 1, kind: input, shape index: {}]
  %s2 = inlined_call_operand.hbm [shape: f32[2,32], index: 2, kind: output, shape index: {}]
  %s3 = sld [smem:[#allocation0]]
  $region34: #{tpu_custom_call.1} parent=0
    _
  %s5 = ssub.s32 1, %s3
  %s6 = scalar_select 0, %s5, %s3
  $region1: #{tpu_custom_call.1} parent=0
    #allocation3 [shape = 'u8[2048]{0}', space=vmem, size = 0x800, scoped, tag = 'input window, operand 0, single buffered']
    #allocation4 [shape = 's32[1]{0}', space=sflag, size = 0x4, scoped, tag = 'scoped memory for tpu_custom_call.1']
    #allocation5 [shape = 's32[1]{0}', space=sflag, size = 0x4, scoped, tag = 'scoped memory for tpu_custom_call.1']
    #allocation6 [shape = 'u8[2048]{0}', space=vmem, size = 0x800, scoped, tag = 'input window, operand 1, single buffered']
    #allocation7 [shape = 's32[1]{0}', space=sflag, size = 0x4, scoped, tag = 'scoped memory for tpu_custom_call.1']
    #allocation8 [shape = 'u8[1024]{0}', space=vmem, size = 0x400, scoped, tag = 'output window, operand 0, single buffered']
    %7 = vsyncpa [#allocation4], 0
    %8 = vsyncpa [#allocation7], 0
    %9 = vsyncpa [#allocation5], 0
    // Predicated region
    $region2: #{tpu_custom_call.1} parent=1 // pred_check
      _
    $region3: #{tpu_custom_call.1} parent=1 // pred_check_branch
      %11 = sbr.rel (0) target = $region5
    $region4: #{tpu_custom_call.1} parent=1 // pred_region
      %s13 = ssub.s32 64, 64
      %14 = vsyncadd [#allocation4], %s13
      %s15 = sshll.u32 [#allocation3], 4
      %s16 = int_to_ptr.vmem [resolvable:$true] %s15
      %21 = dma.hbm_to_vmem [thread:$0]  %s0, 64, %s16, [#allocation4], 32, 32, 2
    $region5: #{tpu_custom_call.1} parent=1 // pred_fallthru
      _
    // Predicated region
    $region6: #{tpu_custom_call.1} parent=1 // pred_check
      _
    $region7: #{tpu_custom_call.1} parent=1 // pred_check_branch
      %23 = sbr.rel (0) target = $region9
    $region8: #{tpu_custom_call.1} parent=1 // pred_region
      %s25 = ssub.s32 64, 64
      %26 = vsyncadd [#allocation7], %s25
      %s27 = sshll.u32 [#allocation6], 4
      %s28 = int_to_ptr.vmem [resolvable:$true] %s27
      %33 = dma.hbm_to_vmem [thread:$0]  %s1, 64, %s28, [#allocation7], 32, 32, 2
    $region9: #{tpu_custom_call.1} parent=1 // pred_fallthru
      _
    // Predicated region
    $region10: #{tpu_custom_call.1} parent=1 // pred_check
      _
    $region11: #{tpu_custom_call.1} parent=1 // pred_check_branch
      %35 = sbr.rel (0) target = $region13
    $region12: #{tpu_custom_call.1} parent=1 // pred_region
      %36 = dma.done [#allocation4], 64
    $region13: #{tpu_custom_call.1} parent=1 // pred_fallthru
      _
    // Predicated region
    $region14: #{tpu_custom_call.1} parent=1 // pred_check
      _
    $region15: #{tpu_custom_call.1} parent=1 // pred_check_branch
      %38 = sbr.rel (0) target = $region17
    $region16: #{tpu_custom_call.1} parent=1 // pred_region
      %39 = dma.done [#allocation7], 64
    $region17: #{tpu_custom_call.1} parent=1 // pred_fallthru
      _
    %p40 = scmp.eq.s32.totalorder 0, 0
    // Predicated region
    $region18: #{tpu_custom_call.1} parent=1 // pred_check
      %p41 = pneg %p40
    $region19: #{tpu_custom_call.1} parent=1 // pred_check_branch
      %43 = sbr.rel (%p41) target = $region21
    $region20: #{tpu_custom_call.1} parent=1 // pred_region
      %44 = vst [vmem:[#allocation2] sm:$0x3] 0.0
    $region21: #{tpu_custom_call.1} parent=1 // pred_fallthru
      _
    %v45 = vld [vmem:[#allocation6] sm:$0x3]
    %v46 = vld [vmem:[#allocation6 + $0x2] sm:$0x3]
    %v47 = vld [vmem:[#allocation3] sm:$0x3]
    %v48 = vld [vmem:[#allocation3 + $0x2] sm:$0x3]
    %v49 = vmul.f32 %v45, %v47
    %v50 = vmul.f32 %v46, %v48
    %v51 = vld [vmem:[#allocation2] sm:$0x3]
    %vm52 = vcmask 1041408
    %v53 = vsel %vm52, %v49, 0.0
    %v54 = vrot.slane %v53, 4
    %v55 = vadd.f32 %v53, %v54
    %v56 = vrot.slane %v55, 2
    %v57 = vadd.f32 %v55, %v56
    %v58 = vrot.slane %v57, 1
    %v59 = vadd.f32 %v57, %v58
    %v60 = vsel %vm52, %v50, 0.0
    %v61 = vrot.slane %v60, 4
    %v62 = vadd.f32 %v60, %v61
    %v63 = vrot.slane %v62, 2
    %v64 = vadd.f32 %v62, %v63
    %v65 = vrot.slane %v64, 1
    %v66 = vadd.f32 %v64, %v65
    %vm69 = vcmask 1041409
    %v70 = vsel %vm69, %v66, %v59
    %v72 = vadd.f32 %v51, %v70
    %73 = vst [vmem:[#allocation2] sm:$0x3] %v72
    // Predicated region
    $region22: #{tpu_custom_call.1} parent=1 // pred_check
      %p74 = pneg %p40
    $region23: #{tpu_custom_call.1} parent=1 // pred_check_branch
      %76 = sbr.rel (%p74) target = $region25
    $region24: #{tpu_custom_call.1} parent=1 // pred_region
      %v77 = vld [vmem:[#allocation2] sm:$0x3]
      %79 = vrot.lane.b32.xlu0 %v77, 96
      %v80 = vpop.permute.xlu0 %79
      %v82 = vadd.f32 %v77, %v80
      %83 = vrot.lane.b32.xlu0 %v77, 64
      %v84 = vpop.permute.xlu0 %83
      %v86 = vadd.f32 %v82, %v84
      %87 = vrot.lane.b32.xlu0 %v77, 32
      %v88 = vpop.permute.xlu0 %87
      %v90 = vadd.f32 %v86, %v88
      %v91 = vtanh.pop %v90
      %vm92 = vcmask 254976
      %93 = vst.msk [vmem:[#allocation8] sm:$0x3] %vm92, %v91
    $region25: #{tpu_custom_call.1} parent=1 // pred_fallthru
      _
    // Predicated region
    $region26: #{tpu_custom_call.1} parent=1 // pred_check
      _
    $region27: #{tpu_custom_call.1} parent=1 // pred_check_branch
      %95 = sbr.rel (0) target = $region29
    $region28: #{tpu_custom_call.1} parent=1 // pred_region
      %s97 = ssub.s32 32, 32
      %98 = vsyncadd [#allocation5], %s97
      %s100 = sshll.u32 [#allocation8], 4
      %s101 = int_to_ptr.vmem [resolvable:$true] %s100
      %103 = dma.vmem_to_hbm [thread:$0]  %s101, 32, %s2, [#allocation5]
    $region29: #{tpu_custom_call.1} parent=1 // pred_fallthru
      _
    // Predicated region
    $region30: #{tpu_custom_call.1} parent=1 // pred_check
      _
    $region31: #{tpu_custom_call.1} parent=1 // pred_check_branch
      %105 = sbr.rel (0) target = $region33
    $region32: #{tpu_custom_call.1} parent=1 // pred_region
      %106 = dma.done [#allocation5], 32
    $region33: #{tpu_custom_call.1} parent=1 // pred_fallthru
      _
    %107 = vsyncpa [#allocation4], 1
    %108 = vsyncpa [#allocation7], 1
    %109 = vsyncpa [#allocation5], 1

</llo_original>
